<compile_context>
chip_gen: v5e
topology: v5e:2x2
jax: 0.10.0
libtpu: 0.0.40
codegen_flags: <defaults>
</compile_context>

<pallas_src>
import jax
import jax.numpy as jnp
from jax.experimental import pallas as pl
from jax.experimental.pallas import tpu as pltpu


_MIN_CHUNK_BYTES = 8 * 1024 * 1024   # don't bother splitting below ~8 MiB
_MAX_CHUNKS = 4                      # a few in-flight DMAs is plenty for memcpy


def _row_chunks(dim0: int, bytes_per_row: int):
    """Static (start, size) chunks along the leading axis."""
    total_bytes = dim0 * bytes_per_row
    if total_bytes <= _MIN_CHUNK_BYTES or dim0 <= 1:
        return [(0, dim0)]
    n = min(_MAX_CHUNKS, dim0, max(1, total_bytes // _MIN_CHUNK_BYTES))
    rows = -(-dim0 // n)  # ceil division
    chunks = []
    start = 0
    while start < dim0:
        size = min(rows, dim0 - start)
        chunks.append((start, size))
        start += size
    return chunks


def _make_copy_kernel(chunks):
    """Kernel body: issue one HBM->HBM DMA per static chunk, then wait on all."""

    def kernel(x_ref, o_ref, sems):
        copies = []
        for idx, (start, size) in enumerate(chunks):
            if start == 0 and size == x_ref.shape[0]:
                src, dst = x_ref, o_ref              # whole-array copy
            else:
                src = x_ref.at[pl.ds(start, size)]
                dst = o_ref.at[pl.ds(start, size)]
            cp = pltpu.make_async_copy(src, dst, sems.at[idx])
            cp.start()
            copies.append(cp)
        for cp in copies:
            cp.wait()

    return kernel


def _identity_copy(x: jax.Array) -> jax.Array:
    """Materialize y = x into a fresh HBM buffer with a pure-DMA Pallas kernel."""
    orig_shape = x.shape
    if x.ndim == 0:
        x = x.reshape(1)

    itemsize = jnp.dtype(x.dtype).itemsize
    bytes_per_row = itemsize
    for d in x.shape[1:]:
        bytes_per_row *= d
    chunks = _row_chunks(x.shape[0], bytes_per_row)

    out = pl.pallas_call(
        _make_copy_kernel(chunks),
        out_shape=jax.ShapeDtypeStruct(x.shape, x.dtype),
        in_specs=[pl.BlockSpec(memory_space=pl.ANY)],
        out_specs=pl.BlockSpec(memory_space=pl.ANY),
        scratch_shapes=[pltpu.SemaphoreType.DMA((len(chunks),))],
        cost_estimate=pl.CostEstimate(
            flops=0,
            transcendentals=0,
            bytes_accessed=2 * x.size * itemsize,
        ),
    )(x)
    return out.reshape(orig_shape)


def identity(x: jax.Array, *, materialize: bool = False) -> jax.Array:
    """Forward pass of nn.Identity.

    By default this is a true identity (returns x; zero HBM traffic — the only
    change that beats the copy roofline).  Set materialize=True only if a
    distinct output buffer is a hard requirement; that path runs the Pallas
    HBM->HBM DMA copy kernel.
    """
    if x.size == 0:
        return x
    if not materialize:
        return x
    return _identity_copy(x)


if __name__ == "__main__":
    key = jax.random.PRNGKey(0)
    x = jax.random.normal(key, (2, 4, 16, 16), dtype=jnp.float32)

    # Default path: true identity (no copy at all).
    y0 = identity(x)
    assert y0.shape == x.shape and y0.dtype == x.dtype
    assert bool(jnp.all(y0 == x))

    # Kernel path: materialized HBM->HBM DMA copy.
    y1 = identity(x, materialize=True)
    y1 = jax.block_until_ready(y1)
    assert y1.shape == x.shape and y1.dtype == x.dtype
    assert bool(jnp.all(y1 == x))

    print("KERNEL_OK")
</pallas_src>

<mosaic_0001>
module attributes {stable_mosaic.version = 11 : i64} {
  func.func @kernel(%arg0: memref<2x4x16x16xf32, #tpu.memory_space<any>>, %arg1: memref<2x4x16x16xf32, #tpu.memory_space<any>>, %arg2: memref<1x!tpu.dma_semaphore, #tpu.memory_space<semaphore_mem>>) attributes {dimension_semantics = [], scalar_prefetch = 0 : i64, scratch_operands = 1 : i64, tpu.core_type = #tpu.core_type<tc>} {
    %c0_i32 = arith.constant 0 : i32
    %0 = tpu.memref_slice %arg2[%c0_i32] : memref<1x!tpu.dma_semaphore, #tpu.memory_space<semaphore_mem>> -> memref<1x!tpu.dma_semaphore, #tpu.memory_space<semaphore_mem>>
    %1 = tpu.memref_squeeze %0 : memref<1x!tpu.dma_semaphore, #tpu.memory_space<semaphore_mem>> -> memref<!tpu.dma_semaphore, #tpu.memory_space<semaphore_mem>>
    tpu.enqueue_dma source(%arg0 : memref<2x4x16x16xf32, #tpu.memory_space<any>>) target(%arg1 : memref<2x4x16x16xf32, #tpu.memory_space<any>>) target_semaphore(%1 : memref<!tpu.dma_semaphore, #tpu.memory_space<semaphore_mem>>)
    %c0_i32_0 = arith.constant 0 : i32
    %2 = tpu.memref_slice %arg2[%c0_i32_0] : memref<1x!tpu.dma_semaphore, #tpu.memory_space<semaphore_mem>> -> memref<1x!tpu.dma_semaphore, #tpu.memory_space<semaphore_mem>>
    %3 = tpu.memref_squeeze %2 : memref<1x!tpu.dma_semaphore, #tpu.memory_space<semaphore_mem>> -> memref<!tpu.dma_semaphore, #tpu.memory_space<semaphore_mem>>
    tpu.wait_dma2 semaphore(%3 : memref<!tpu.dma_semaphore, #tpu.memory_space<semaphore_mem>>) src(%arg0 : memref<2x4x16x16xf32, #tpu.memory_space<any>>) dst(%arg1 : memref<2x4x16x16xf32, #tpu.memory_space<any>>)
    return
  }
}

</mosaic_0001>

<llo_original>
// kernel: tpu_custom_call.1
$region0: #{tpu_custom_call.1}
  #allocation0 [shape = 'u32[]', space=smem, size = 0x4, offset = 0x4, fixed_abs, tag = 'smem constant byte address 0x4 - core index']
  #allocation1 [shape = 'u32[72,128]{1,0:T(1,128)}', space=vmem, size = 0x9000, scoped, tag = 'internal scratch']
  #allocation2 [shape = 's32[1]{0}', space=sflag, size = 0x4, scoped, tag = 'scratch operand']
  #allocation3 [shape = 's32[]', space=sflag, size = 0x4, offset = 0, fixed_abs, tag = 'sflag constant byte address 0x0 - dummy sync flag']
  #allocation4 [shape = 'u32[0]{0}', space=smem, size = 0, offset = 0, fixed_abs, tag = 'smem constant byte address 0x0 - null']
  %s0 = inlined_call_operand.hbm [shape: f32[2,4,16,16], index: 0, kind: input, shape index: {}]
  %s1 = inlined_call_operand.hbm [shape: f32[2,4,16,16], index: 1, kind: output, shape index: {}]
  %s2 = sld [smem:[#allocation0]]
  $region2: #{tpu_custom_call.1} parent=0
    _
  %s4 = ssub.s32 1, %s2
  %s5 = scalar_select 0, %s4, %s2
  %s7 = sshll.u32 1, 14
  %s8 = sxor.u32 4294967295, %s7
  %s10 = sshll.u32 %s0, 4
  %s11 = int_to_ptr.hbm [resolvable:$true] %s10
  %s12 = sshll.u32 %s1, 4
  %s13 = int_to_ptr.hbm [resolvable:$true] %s12
  %16 = dma.general %s11, 2048, %s13, [#allocation2], [#allocation3], [#allocation4], 0, 0
  %s17 = smul.u32 2, 4
  %s18 = smul.u32 %s17, 16
  %s19 = smul.u32 %s18, 1
  %s20 = sshll.u32 %s19, 4
  %21 = dma.done [#allocation2], %s20
  %22 = vsyncmov [#allocation2]
  %s23 = vpop.sfrf %22
  %p24 = scmp.eq.s32.totalorder %s23, 0
  %p25 = pneg %p24
  %27 = shalt.err (%p25)

</llo_original>
